<compile_context>
chip_gen: v5e
topology: v5e:2x2
jax: 0.10.0
libtpu: 0.0.40
codegen_flags: <defaults>
</compile_context>

<pallas_src>
import jax
import jax.numpy as jnp
from jax import lax
from jax.experimental import pallas as pl
from jax.experimental.pallas import tpu as pltpu

_LANES = 128


def _lovasz_hinge_kernel(tri_ref, ltri_ref, gidx_ref, gts_ref,
                         err_ref, gt_ref, out_ref, carry_ref):
    # tri_ref  : (128,128) bf16  upper-triangular ones, T[i,j]=1 iff i<=j   (resident)
    # ltri_ref : (TK,TK)   bf16  strict lower-triangular ones, L[r,c]=1 iff c<r (resident)
    # gidx_ref : (TK,128)  f32   1-based local element index within a tile  (resident)
    # gts_ref  : (1,128)   f32   per-image positive count (same value in every lane)
    # err_ref  : (TK,128)  f32   hinge errors, sorted descending (row-major over N)
    # gt_ref   : (TK,128)  bf16  labels permuted by the same sort, values in {0,1}
    # out_ref  : (1,128)   f32   per-image per-lane partial loss sums (resident over t)
    # carry_ref: (1,128)   f32   running cumsum(gt) carried across pixel tiles (scratch)
    t = pl.program_id(1)

    @pl.when(t == 0)
    def _init():
        out_ref[...] = jnp.zeros_like(out_ref)
        carry_ref[...] = jnp.zeros_like(carry_ref)

    gt_bf = gt_ref[...]
    gt = gt_bf.astype(jnp.float32)
    err = err_ref[...]
    tk, lanes = err.shape
    nelem = tk * lanes

    # Intra-row inclusive prefix sums along lanes on the MXU.
    # bf16 x bf16 {0,1} with f32 accumulation is exact.
    p = jnp.dot(gt_bf, tri_ref[...], preferred_element_type=jnp.float32)     # (TK,128)

    # Exclusive cross-row carries inside the tile: strict-lower (TK,TK) @ row sums.
    # Row sums <= 128 are exact in bf16; f32 accumulation keeps the result exact.
    s = jnp.sum(gt, axis=1, keepdims=True)                                   # (TK,1)
    s_b = jnp.broadcast_to(s, (tk, lanes)).astype(jnp.bfloat16)
    rowcarry = jnp.dot(ltri_ref[...], s_b, preferred_element_type=jnp.float32)

    carry_in = carry_ref[...]                      # cumsum from previous tiles (1,128)
    cs = p + rowcarry + carry_in                   # inclusive cumsum(gt) at each element

    gts = gts_ref[...]                             # (1,128)
    gp1 = gidx_ref[...] + (t * nelem).astype(jnp.float32)   # 1-based global index, exact

    # Fused Lovasz gradient with a single (exact) reciprocal:
    #   jac[g]   = 1 - inter/union          inter   = gts - cs[g]
    #   jac[g-1] = 1 - inter_p/union_p      union   = gts + (g+1) - cs[g]
    #   grad[g]  = jac[g]-jac[g-1] = (inter_p*union - inter*union_p)/(union*union_p)
    # First element of each image (g==0): grad = jac[0], realized by inter_p=union_p=1.
    inter = gts - cs
    union = gts + gp1 - cs
    inter_p = inter + gt                           # = gts - cs[g-1]
    union_p = union + (gt - 1.0)                   # = gts + g - cs[g-1]
    first = gp1 == 1.0
    inter_p = jnp.where(first, 1.0, inter_p)
    union_p = jnp.where(first, 1.0, union_p)

    grad = (inter_p * union - inter * union_p) * pl.reciprocal(union * union_p)
    prod = jnp.maximum(err, 0.0) * grad

    # Accumulate per-lane partial sums in the resident output block (summed in wrapper).
    out_ref[...] += jnp.sum(prod, axis=0, keepdims=True)
    # Advance the cross-tile cumsum carry.
    carry_ref[...] = carry_in + jnp.sum(s, axis=0, keepdims=True)


def lovasz_hinge(logits, labels, max_rows_per_tile=512):
    """logits, labels: (B, ...) float. Returns scalar loss (float32), per_image=True."""
    B = logits.shape[0]
    N = 1
    for d in logits.shape[1:]:
        N *= d
    assert 1 <= N < (1 << 24), "per-image pixel count must be < 2^24 for exact f32 counts"

    logits_f = logits.reshape(B, N).astype(jnp.float32)
    labels_f = labels.reshape(B, N).astype(jnp.float32)

    signs = 2.0 * labels_f - 1.0
    errors = 1.0 - logits_f * signs

    # TODO(synk): descending key/value sort has no Pallas TPU primitive; done with lax.sort.
    neg_sorted, gt_sorted = lax.sort((-errors, labels_f), dimension=1, num_keys=1)
    errors_sorted = -neg_sorted

    gts = jnp.sum(labels_f, axis=1)                       # per-image positives (exact)

    # ---- tiling: TK rows (of 128 lanes) per grid step, padded rows are (err=0, gt=0)
    #      appended AFTER the sort, so they contribute exactly zero to the loss. ----
    K0 = -(-N // _LANES)
    TK = min(max_rows_per_tile, K0)
    TK = -(-TK // 8) * 8                                  # multiple of 8 sublanes
    K = -(-K0 // TK) * TK                                 # pad rows to a multiple of TK
    T = K // TK
    N_pad = K * _LANES
    pad = N_pad - N
    if pad:
        errors_sorted = jnp.pad(errors_sorted, ((0, 0), (0, pad)))
        gt_sorted = jnp.pad(gt_sorted, ((0, 0), (0, pad)))

    err3 = errors_sorted.reshape(B, K, _LANES)
    gt3 = gt_sorted.reshape(B, K, _LANES).astype(jnp.bfloat16)     # {0,1}: exact in bf16
    gtsb = jnp.broadcast_to(gts.reshape(B, 1, 1), (B, 1, _LANES)).astype(jnp.float32)

    # Resident constants (constant block index -> loaded once, stay in VMEM).
    ri = lax.broadcasted_iota(jnp.int32, (_LANES, _LANES), 0)
    ci = lax.broadcasted_iota(jnp.int32, (_LANES, _LANES), 1)
    tri = (ri <= ci).astype(jnp.bfloat16)                          # lane prefix-sum

    rk = lax.broadcasted_iota(jnp.int32, (TK, TK), 0)
    ck = lax.broadcasted_iota(jnp.int32, (TK, TK), 1)
    ltri = (ck < rk).astype(jnp.bfloat16)                          # exclusive row carries

    gidx1 = jnp.arange(1, TK * _LANES + 1, dtype=jnp.float32).reshape(TK, _LANES)

    # VMEM budget: double-buffered err+gt tiles, resident constants, elementwise
    # temporaries (generous), out/carry blocks; 2x headroom, capped at v7x's 64 MiB.
    est = (2 * TK * _LANES * (4 + 2)
           + _LANES * _LANES * 2 + TK * TK * 2 + TK * _LANES * 4
           + 12 * TK * _LANES * 4
           + 4 * _LANES * 4)
    vmem_limit = int(min(64 * 1024 * 1024, max(4 * 1024 * 1024, 2 * est)))

    out = pl.pallas_call(
        _lovasz_hinge_kernel,
        out_shape=jax.ShapeDtypeStruct((B, 1, _LANES), jnp.float32),
        grid_spec=pltpu.PrefetchScalarGridSpec(
            num_scalar_prefetch=0,
            grid=(B, T),
            in_specs=[
                pl.BlockSpec((_LANES, _LANES), lambda b, t: (0, 0)),             # tri
                pl.BlockSpec((TK, TK), lambda b, t: (0, 0)),                     # ltri
                pl.BlockSpec((TK, _LANES), lambda b, t: (0, 0)),                 # gidx1
                pl.BlockSpec((pl.Squeezed(), 1, _LANES), lambda b, t: (b, 0, 0)),    # gts
                pl.BlockSpec((pl.Squeezed(), TK, _LANES), lambda b, t: (b, t, 0)),   # err
                pl.BlockSpec((pl.Squeezed(), TK, _LANES), lambda b, t: (b, t, 0)),   # gt
            ],
            out_specs=pl.BlockSpec((pl.Squeezed(), 1, _LANES), lambda b, t: (b, 0, 0)),
            scratch_shapes=[pltpu.VMEM((1, _LANES), jnp.float32)],               # carry
        ),
        compiler_params=pltpu.CompilerParams(
            dimension_semantics=("parallel", "arbitrary"),
            vmem_limit_bytes=vmem_limit,
        ),
    )(tri, ltri, gidx1, gtsb, err3, gt3)

    per_image = jnp.sum(out[:, 0, :], axis=-1)
    return jnp.mean(per_image)


def _lovasz_hinge_reference(logits, labels):
    """Pure-JAX reference mirroring the original torch implementation (per_image=True)."""
    B = logits.shape[0]
    N = 1
    for d in logits.shape[1:]:
        N *= d
    logits_f = logits.reshape(B, N).astype(jnp.float32)
    labels_f = labels.reshape(B, N).astype(jnp.float32)

    def one_image(log, lab):
        signs = 2.0 * lab - 1.0
        errors = 1.0 - log * signs
        order = jnp.argsort(-errors)
        errors_sorted = errors[order]
        gt_sorted = lab[order]
        gts = jnp.sum(gt_sorted)
        intersection = gts - jnp.cumsum(gt_sorted)
        union = gts + jnp.cumsum(1.0 - gt_sorted)
        jaccard = 1.0 - intersection / union
        grad = jnp.concatenate([jaccard[:1], jaccard[1:] - jaccard[:-1]])
        return jnp.dot(jnp.maximum(errors_sorted, 0.0), grad)

    return jnp.mean(jax.vmap(one_image)(logits_f, labels_f))


if __name__ == "__main__":
    key = jax.random.PRNGKey(0)
    k1, k2, k3, k4 = jax.random.split(key, 4)

    # Case 1: tiny images (one tile per image).
    B, H, W = 2, 16, 16
    logits = jax.random.normal(k1, (B, H, W), dtype=jnp.float32)
    target = (jax.random.uniform(k2, (B, H, W)) > 0.5).astype(jnp.float32)
    loss = jax.block_until_ready(lovasz_hinge(logits, target))
    ref = jax.block_until_ready(_lovasz_hinge_reference(logits, target))
    assert jnp.allclose(loss, ref, rtol=1e-4, atol=1e-4), (loss, ref)

    # Case 2: multi-tile path (exercises the cross-tile cumsum carry / accumulators)
    # with a small tile size so shapes stay small.
    B2, H2, W2 = 2, 32, 64
    logits2 = jax.random.normal(k3, (B2, H2, W2), dtype=jnp.float32)
    target2 = (jax.random.uniform(k4, (B2, H2, W2)) > 0.5).astype(jnp.float32)
    loss2 = jax.block_until_ready(lovasz_hinge(logits2, target2, max_rows_per_tile=8))
    ref2 = jax.block_until_ready(_lovasz_hinge_reference(logits2, target2))
    assert jnp.allclose(loss2, ref2, rtol=1e-4, atol=1e-4), (loss2, ref2)

    print("KERNEL_OK")
</pallas_src>

<mosaic_0001>
module attributes {stable_mosaic.version = 11 : i64} {
  func.func @_lovasz_hinge_kernel(%arg0: i32, %arg1: i32, %arg2: memref<128x128xbf16, #tpu.memory_space<vmem>>, %arg3: memref<8x8xbf16, #tpu.memory_space<vmem>>, %arg4: memref<8x128xf32, #tpu.memory_space<vmem>>, %arg5: memref<1x1x128xf32, #tpu.memory_space<vmem>>, %arg6: memref<1x8x128xf32, #tpu.memory_space<vmem>>, %arg7: memref<1x8x128xbf16, #tpu.memory_space<vmem>>, %arg8: memref<1x1x128xf32, #tpu.memory_space<vmem>>, %arg9: memref<1x128xf32, #tpu.memory_space<vmem>>) attributes {dimension_semantics = [#tpu.dimension_semantics<parallel>, #tpu.dimension_semantics<arbitrary>], iteration_bounds = array<i64: 2, 1>, scalar_prefetch = 0 : i64, scratch_operands = 1 : i64, tpu.core_type = #tpu.core_type<tc>, window_params = [{pipeline_mode = #tpu.pipeline_mode<synchronous>, transform_indices = @transform_0, window_bounds = array<i64: 128, 128>}, {pipeline_mode = #tpu.pipeline_mode<synchronous>, transform_indices = @transform_1, window_bounds = array<i64: 8, 8>}, {pipeline_mode = #tpu.pipeline_mode<synchronous>, transform_indices = @transform_2, window_bounds = array<i64: 8, 128>}, {transform_indices = @transform_3, window_bounds = array<i64: 1, 1, 128>}, {transform_indices = @transform_4, window_bounds = array<i64: 1, 8, 128>}, {transform_indices = @transform_5, window_bounds = array<i64: 1, 8, 128>}, {transform_indices = @transform_6, window_bounds = array<i64: 1, 1, 128>}]} {
    %c0_i32 = arith.constant 0 : i32
    %0 = arith.cmpi eq, %arg1, %c0_i32 : i32
    %1 = arith.extui %0 : i1 to i32
    %c0_i32_0 = arith.constant 0 : i32
    %2 = arith.cmpi ne, %1, %c0_i32_0 : i32
    scf.if %2 {
      %cst_34 = arith.constant 0.000000e+00 : f32
      %65 = vector.broadcast %cst_34 : f32 to vector<1x128xf32>
      %c0_35 = arith.constant 0 : index
      %c0_36 = arith.constant 0 : index
      %c0_37 = arith.constant 0 : index
      %66 = vector.load %arg8[%c0_35, %c0_36, %c0_37] : memref<1x1x128xf32, #tpu.memory_space<vmem>>, vector<1x1x128xf32>
      %67 = vector.shape_cast %66 : vector<1x1x128xf32> to vector<1x128xf32>
      %68 = vector.shape_cast %65 : vector<1x128xf32> to vector<1x1x128xf32>
      tpu.vector_store %arg8[%c0_35, %c0_36, %c0_37], %68 {strides = array<i32>} : memref<1x1x128xf32, #tpu.memory_space<vmem>>, vector<1x1x128xf32>,
      %cst_38 = arith.constant 0.000000e+00 : f32
      %69 = vector.broadcast %cst_38 : f32 to vector<1x128xf32>
      %c0_39 = arith.constant 0 : index
      %c0_40 = arith.constant 0 : index
      %70 = vector.load %arg9[%c0_39, %c0_40] : memref<1x128xf32, #tpu.memory_space<vmem>>, vector<1x128xf32>
      tpu.vector_store %arg9[%c0_39, %c0_40], %69 {strides = array<i32>} : memref<1x128xf32, #tpu.memory_space<vmem>>, vector<1x128xf32>,
    } else {
    }
    %c0 = arith.constant 0 : index
    %c0_1 = arith.constant 0 : index
    %c0_2 = arith.constant 0 : index
    %3 = vector.load %arg7[%c0, %c0_1, %c0_2] : memref<1x8x128xbf16, #tpu.memory_space<vmem>>, vector<1x8x128xbf16>
    %4 = vector.shape_cast %3 : vector<1x8x128xbf16> to vector<8x128xbf16>
    %5 = arith.extf %4 : vector<8x128xbf16> to vector<8x128xf32>
    %c0_3 = arith.constant 0 : index
    %c0_4 = arith.constant 0 : index
    %c0_5 = arith.constant 0 : index
    %6 = vector.load %arg6[%c0_3, %c0_4, %c0_5] : memref<1x8x128xf32, #tpu.memory_space<vmem>>, vector<1x8x128xf32>
    %7 = vector.shape_cast %6 : vector<1x8x128xf32> to vector<8x128xf32>
    %c0_6 = arith.constant 0 : index
    %c0_7 = arith.constant 0 : index
    %8 = vector.load %arg2[%c0_6, %c0_7] : memref<128x128xbf16, #tpu.memory_space<vmem>>, vector<128x128xbf16>
    %cst = arith.constant dense<0.000000e+00> : vector<8x128xf32>
    %9 = tpu.matmul %4, %8, %cst {dimension_numbers = #tpu.dot_dimension_numbers<[1], [0], [0], [1], [0, 0, 1, 1], [], []>} : vector<8x128xbf16>, vector<128x128xbf16>, vector<8x128xf32> -> vector<8x128xf32>
    %cst_8 = arith.constant dense<0.000000e+00> : vector<8xf32>
    %10 = vector.multi_reduction <add>, %5, %cst_8 [1] : vector<8x128xf32> to vector<8xf32>
    %11 = vector.shape_cast %10 : vector<8xf32> to vector<8x1xf32>
    %12 = vector.shape_cast %11 : vector<8x1xf32> to vector<8x1xf32>
    %13 = vector.broadcast %12 : vector<8x1xf32> to vector<8x128xf32>
    %14 = arith.truncf %13 : vector<8x128xf32> to vector<8x128xbf16>
    %c0_9 = arith.constant 0 : index
    %c0_10 = arith.constant 0 : index
    %15 = vector.load %arg3[%c0_9, %c0_10] : memref<8x8xbf16, #tpu.memory_space<vmem>>, vector<8x8xbf16>
    %cst_11 = arith.constant dense<0.000000e+00> : vector<8x128xf32>
    %16 = tpu.matmul %15, %14, %cst_11 {dimension_numbers = #tpu.dot_dimension_numbers<[1], [0], [0], [1], [0, 0, 1, 1], [], []>} : vector<8x8xbf16>, vector<8x128xbf16>, vector<8x128xf32> -> vector<8x128xf32>
    %c0_12 = arith.constant 0 : index
    %c0_13 = arith.constant 0 : index
    %17 = vector.load %arg9[%c0_12, %c0_13] : memref<1x128xf32, #tpu.memory_space<vmem>>, vector<1x128xf32>
    %18 = arith.addf %9, %16 : vector<8x128xf32>
    %19 = vector.broadcast %17 : vector<1x128xf32> to vector<8x128xf32>
    %20 = arith.addf %18, %19 : vector<8x128xf32>
    %c0_14 = arith.constant 0 : index
    %c0_15 = arith.constant 0 : index
    %c0_16 = arith.constant 0 : index
    %21 = vector.load %arg5[%c0_14, %c0_15, %c0_16] : memref<1x1x128xf32, #tpu.memory_space<vmem>>, vector<1x1x128xf32>
    %22 = vector.shape_cast %21 : vector<1x1x128xf32> to vector<1x128xf32>
    %c0_17 = arith.constant 0 : index
    %c0_18 = arith.constant 0 : index
    %23 = vector.load %arg4[%c0_17, %c0_18] : memref<8x128xf32, #tpu.memory_space<vmem>>, vector<8x128xf32>
    %c1024_i32 = arith.constant 1024 : i32
    %24 = arith.muli %arg1, %c1024_i32 : i32
    %25 = arith.sitofp %24 : i32 to f32
    %26 = vector.broadcast %25 : f32 to vector<8x128xf32>
    %27 = arith.addf %23, %26 : vector<8x128xf32>
    %28 = vector.broadcast %22 : vector<1x128xf32> to vector<8x128xf32>
    %29 = arith.subf %28, %20 : vector<8x128xf32>
    %30 = vector.broadcast %22 : vector<1x128xf32> to vector<8x128xf32>
    %31 = arith.addf %30, %27 : vector<8x128xf32>
    %32 = arith.subf %31, %20 : vector<8x128xf32>
    %33 = arith.addf %29, %5 : vector<8x128xf32>
    %cst_19 = arith.constant 1.000000e+00 : f32
    %34 = vector.broadcast %cst_19 : f32 to vector<8x128xf32>
    %35 = arith.subf %5, %34 : vector<8x128xf32>
    %36 = arith.addf %32, %35 : vector<8x128xf32>
    %cst_20 = arith.constant 1.000000e+00 : f32
    %37 = vector.broadcast %cst_20 : f32 to vector<8x128xf32>
    %38 = arith.cmpf oeq, %27, %37 : vector<8x128xf32>
    %cst_21 = arith.constant 1.000000e+00 : f32
    %39 = vector.broadcast %cst_21 : f32 to vector<8x128xf32>
    %40 = arith.select %38, %39, %33 : vector<8x128xi1>, vector<8x128xf32>
    %cst_22 = arith.constant 1.000000e+00 : f32
    %41 = vector.broadcast %cst_22 : f32 to vector<8x128xf32>
    %42 = arith.select %38, %41, %36 : vector<8x128xi1>, vector<8x128xf32>
    %43 = arith.mulf %40, %32 : vector<8x128xf32>
    %44 = arith.mulf %29, %42 : vector<8x128xf32>
    %45 = arith.subf %43, %44 : vector<8x128xf32>
    %46 = arith.mulf %32, %42 : vector<8x128xf32>
    %47 = tpu.reciprocal %46 : vector<8x128xf32> -> vector<8x128xf32>
    %48 = arith.mulf %45, %47 : vector<8x128xf32>
    %cst_23 = arith.constant 0.000000e+00 : f32
    %49 = vector.broadcast %cst_23 : f32 to vector<8x128xf32>
    %50 = arith.maximumf %7, %49 : vector<8x128xf32>
    %51 = arith.mulf %50, %48 : vector<8x128xf32>
    %c0_24 = arith.constant 0 : index
    %c0_25 = arith.constant 0 : index
    %c0_26 = arith.constant 0 : index
    %52 = vector.load %arg8[%c0_24, %c0_25, %c0_26] : memref<1x1x128xf32, #tpu.memory_space<vmem>>, vector<1x1x128xf32>
    %53 = vector.shape_cast %52 : vector<1x1x128xf32> to vector<1x128xf32>
    %cst_27 = arith.constant dense<0.000000e+00> : vector<128xf32>
    %54 = vector.multi_reduction <add>, %51, %cst_27 [0] : vector<8x128xf32> to vector<128xf32>
    %55 = vector.shape_cast %54 : vector<128xf32> to vector<1x128xf32>
    %56 = arith.addf %53, %55 : vector<1x128xf32>
    %c0_28 = arith.constant 0 : index
    %c0_29 = arith.constant 0 : index
    %c0_30 = arith.constant 0 : index
    %57 = vector.load %arg8[%c0_28, %c0_29, %c0_30] : memref<1x1x128xf32, #tpu.memory_space<vmem>>, vector<1x1x128xf32>
    %58 = vector.shape_cast %57 : vector<1x1x128xf32> to vector<1x128xf32>
    %59 = vector.shape_cast %56 : vector<1x128xf32> to vector<1x1x128xf32>
    tpu.vector_store %arg8[%c0_28, %c0_29, %c0_30], %59 {strides = array<i32>} : memref<1x1x128xf32, #tpu.memory_space<vmem>>, vector<1x1x128xf32>,
    %cst_31 = arith.constant dense<0.000000e+00> : vector<1xf32>
    %60 = vector.multi_reduction <add>, %11, %cst_31 [0] : vector<8x1xf32> to vector<1xf32>
    %61 = vector.shape_cast %60 : vector<1xf32> to vector<1x1xf32>
    %62 = vector.broadcast %61 : vector<1x1xf32> to vector<1x128xf32>
    %63 = arith.addf %17, %62 : vector<1x128xf32>
    %c0_32 = arith.constant 0 : index
    %c0_33 = arith.constant 0 : index
    %64 = vector.load %arg9[%c0_32, %c0_33] : memref<1x128xf32, #tpu.memory_space<vmem>>, vector<1x128xf32>
    tpu.vector_store %arg9[%c0_32, %c0_33], %63 {strides = array<i32>} : memref<1x128xf32, #tpu.memory_space<vmem>>, vector<1x128xf32>,
    return
  }
  func.func @transform_0(%arg0: i32, %arg1: i32) -> (i32, i32) {
    %c0_i32 = arith.constant 0 : i32
    %c0_i32_0 = arith.constant 0 : i32
    %c0_i32_1 = arith.constant 0 : i32
    return %c0_i32, %c0_i32_0 : i32, i32
  }
  func.func @transform_1(%arg0: i32, %arg1: i32) -> (i32, i32) {
    %c0_i32 = arith.constant 0 : i32
    %c0_i32_0 = arith.constant 0 : i32
    %c0_i32_1 = arith.constant 0 : i32
    return %c0_i32, %c0_i32_0 : i32, i32
  }
  func.func @transform_2(%arg0: i32, %arg1: i32) -> (i32, i32) {
    %c0_i32 = arith.constant 0 : i32
    %c0_i32_0 = arith.constant 0 : i32
    %c0_i32_1 = arith.constant 0 : i32
    return %c0_i32, %c0_i32_0 : i32, i32
  }
  func.func @transform_3(%arg0: i32, %arg1: i32) -> (i32, i32, i32) {
    %c0_i32 = arith.constant 0 : i32
    %c0_i32_0 = arith.constant 0 : i32
    %c0_i32_1 = arith.constant 0 : i32
    return %arg0, %c0_i32, %c0_i32_0 : i32, i32, i32
  }
  func.func @transform_4(%arg0: i32, %arg1: i32) -> (i32, i32, i32) {
    %c0_i32 = arith.constant 0 : i32
    %c0_i32_0 = arith.constant 0 : i32
    return %arg0, %arg1, %c0_i32 : i32, i32, i32
  }
  func.func @transform_5(%arg0: i32, %arg1: i32) -> (i32, i32, i32) {
    %c0_i32 = arith.constant 0 : i32
    %c0_i32_0 = arith.constant 0 : i32
    return %arg0, %arg1, %c0_i32 : i32, i32, i32
  }
  func.func @transform_6(%arg0: i32, %arg1: i32) -> (i32, i32, i32) {
    %c0_i32 = arith.constant 0 : i32
    %c0_i32_0 = arith.constant 0 : i32
    %c0_i32_1 = arith.constant 0 : i32
    return %arg0, %c0_i32, %c0_i32_0 : i32, i32, i32
  }
}

</mosaic_0001>

<llo_original>
// kernel: tpu_custom_call.1
$region0: #{tpu_custom_call.1}
  #allocation0 [shape = 'u32[]', space=smem, size = 0x4, offset = 0x4, fixed_abs, tag = 'smem constant byte address 0x4 - core index']
  #allocation1 [shape = 'u32[72,128]{1,0:T(1,128)}', space=vmem, size = 0x9000, scoped, tag = 'internal scratch']
  #allocation2 [shape = 'f32[1,128]{1,0:T(1,128)}', space=vmem, size = 0x200, scoped, tag = 'scratch operand']
  %s0 = inlined_call_operand.hbm [shape: bf16[128,128], index: 0, kind: input, shape index: {}]
  %s1 = inlined_call_operand.hbm [shape: bf16[8,8], index: 1, kind: input, shape index: {}]
  %s2 = inlined_call_operand.hbm [shape: f32[8,128], index: 2, kind: input, shape index: {}]
  %s3 = inlined_call_operand.vmem [shape: f32[2,1,128], index: 3, kind: input, shape index: {}]
  %s4 = inlined_call_operand.hbm [shape: f32[2,8,128], index: 4, kind: input, shape index: {}]
  %s5 = inlined_call_operand.hbm [shape: bf16[2,8,128], index: 5, kind: input, shape index: {}]
  %s6 = inlined_call_operand.hbm [shape: f32[2,1,128], index: 6, kind: output, shape index: {}]
  %s7 = sld [smem:[#allocation0]]
  $region81: #{tpu_custom_call.1} parent=0
    _
  %s9 = ssub.s32 1, %s7
  %s10 = scalar_select 0, %s9, %s7
  $region1: #{tpu_custom_call.1} parent=0
    #allocation3 [shape = 'u8[32768]{0}', space=vmem, size = 0x8000, scoped, tag = 'input window, operand 0, single buffered']
    #allocation4 [shape = 's32[2]{0}', space=sflag, size = 0x8, scoped, tag = 'scoped memory for tpu_custom_call.1']
    #allocation5 [shape = 's32[2]{0}', space=sflag, size = 0x8, scoped, tag = 'scoped memory for tpu_custom_call.1']
    #allocation6 [shape = 'u8[2048]{0}', space=vmem, size = 0x800, scoped, tag = 'input window, operand 1, single buffered']
    #allocation7 [shape = 's32[1]{0}', space=sflag, size = 0x4, scoped, tag = 'scoped memory for tpu_custom_call.1']
    #allocation8 [shape = 'u8[4096]{0}', space=vmem, size = 0x1000, scoped, tag = 'input window, operand 2, single buffered']
    #allocation9 [shape = 'u8[8192]{0}', space=vmem, size = 0x2000, scoped, tag = 'input window, operand 4']
    #allocation10 [shape = 's32[2]{0}', space=sflag, size = 0x8, scoped, tag = 'scoped memory for tpu_custom_call.1']
    #allocation11 [shape = 'u8[4096]{0}', space=vmem, size = 0x1000, scoped, tag = 'input window, operand 5']
    #allocation12 [shape = 'u8[1024]{0}', space=vmem, size = 0x400, scoped, tag = 'output window, operand 0']
    %11 = vsyncpa [#allocation4], 0
    %12 = vsyncpa [#allocation7], 0
    %13 = vsyncpa [#allocation10], 0
    %s14 = scalar_lea.sflag [#allocation10], 1
    %15 = vsyncpa %s14, 0
    %16 = vsyncpa [#allocation5], 0
    %s17 = scalar_lea.sflag [#allocation5], 1
    %18 = vsyncpa %s17, 0
    loop: start=0, step=1, limit=4
    $region2: #{tpu_custom_call.1} parent=1 // loop_pre_header
      _
    $region3: #{tpu_custom_call.1} parent=1 // loop_header
      %s20 = sphi 0, %s24
      %p21 = scmp.ge.s32.totalorder %s20, 4
      %s27 = sphi 0, %s39
      %s28 = sphi 0, %s35
      %s29 = sphi 0, %s27
      %s30 = sphi 0, %s28
      %s31 = sphi 0, %s29
      %s32 = sphi 0, %s30
      %s40 = sphi 0, %s40
      %s42 = sphi 0, %s40
      %s43 = sphi 0, %s42
      %s57 = sphi 0, %s43
      %s61 = sphi 0, %s61
      %s63 = sphi 0, %s61
      %s64 = sphi 0, %s63
      %s78 = sphi 0, %s64
      %s82 = sphi 0, %s82
      %s84 = sphi 0, %s82
      %s85 = sphi 0, %s84
      %s99 = sphi 0, %s85
      %s105 = sphi 0, %s107
      %s108 = sphi 0, %s105
      %s109 = sphi 0, %s108
      %s125 = sphi 0, %s109
      %s133 = sphi 0, %s135
      %s136 = sphi 0, %s133
      %s137 = sphi 0, %s136
      %s153 = sphi 0, %s137
      %s161 = sphi 0, %s163
      %s164 = sphi 0, %s161
      %s165 = sphi 0, %s164
      %s181 = sphi 0, %s165
      %s187 = sphi 0, %s189
      %s190 = sphi 0, %s187
      %s191 = sphi 0, %s190
      %s207 = sphi 0, %s191
    $region4: #{tpu_custom_call.1} parent=1 // loop_header_branch
      %23 = sbr.rel (%p21) target = $region8
    $region5: #{tpu_custom_call.1} parent=1 // loop_body
      %s25 = ssub.s32 %s20, 1
      %s26 = ssub.s32 %s20, 2
      %s33 = sadd.s32 1, %s28
      %p34 = scmp.ge.s32.totalorder %s33, 1
      %s35 = scalar_select %p34, 0, %s33
      %s36 = sadd.s32 1, %s27
      %s37 = scalar_select %p34, %s36, %s27
      %p38 = scmp.ge.s32.totalorder %s37, 2
      %s39 = scalar_select %p38, 0, %s37
      %s41 = sadd.s32 %s40, 1
      %p44 = scmp.eq.s32.totalorder %s20, 1
      %p45 = scmp.ne.s32.totalorder %s40, %s42
      %p46 = scmp.eq.s32.totalorder %s20, 0
      %p47 = por %p45, %p46
      %p48 = scmp.ne.s32.totalorder %s40, %s42
      %p49 = scmp.eq.s32.totalorder %s25, 1
      %p50 = por %p48, %p49
      %p51 = scmp.ne.s32.totalorder %s42, %s43
      %p52 = scmp.eq.s32.totalorder %s25, 0
      %p53 = por %p51, %p52
      %p54 = scmp.ne.s32.totalorder %s42, %s43
      %p55 = scmp.eq.s32.totalorder %s26, 1
      %p56 = por %p54, %p55
      %p58 = scmp.ne.s32.totalorder %s43, %s57
      %p59 = scmp.eq.s32.totalorder %s26, 0
      %p60 = por %p58, %p59
      %s62 = sadd.s32 %s61, 1
      %p65 = scmp.eq.s32.totalorder %s20, 1
      %p66 = scmp.ne.s32.totalorder %s61, %s63
      %p67 = scmp.eq.s32.totalorder %s20, 0
      %p68 = por %p66, %p67
      %p69 = scmp.ne.s32.totalorder %s61, %s63
      %p70 = scmp.eq.s32.totalorder %s25, 1
      %p71 = por %p69, %p70
      %p72 = scmp.ne.s32.totalorder %s63, %s64
      %p73 = scmp.eq.s32.totalorder %s25, 0
      %p74 = por %p72, %p73
      %p75 = scmp.ne.s32.totalorder %s63, %s64
      %p76 = scmp.eq.s32.totalorder %s26, 1
      %p77 = por %p75, %p76
      %p79 = scmp.ne.s32.totalorder %s64, %s78
      %p80 = scmp.eq.s32.totalorder %s26, 0
      %p81 = por %p79, %p80
      %s83 = sadd.s32 %s82, 1
      %p86 = scmp.eq.s32.totalorder %s20, 1
      %p87 = scmp.ne.s32.totalorder %s82, %s84
      %p88 = scmp.eq.s32.totalorder %s20, 0
      %p89 = por %p87, %p88
      %p90 = scmp.ne.s32.totalorder %s82, %s84
      %p91 = scmp.eq.s32.totalorder %s25, 1
      %p92 = por %p90, %p91
      %p93 = scmp.ne.s32.totalorder %s84, %s85
      %p94 = scmp.eq.s32.totalorder %s25, 0
      %p95 = por %p93, %p94
      %p96 = scmp.ne.s32.totalorder %s84, %s85
      %p97 = scmp.eq.s32.totalorder %s26, 1
      %p98 = por %p96, %p97
      %p100 = scmp.ne.s32.totalorder %s85, %s99
      %p101 = scmp.eq.s32.totalorder %s26, 0
      %p102 = por %p100, %p101
      %s103 = ssub.s32 %s27, %s39
      %p104 = scmp.eq.s32.totalorder %s103, 0
      %s106 = sadd.s32 %s105, 1
      %s107 = scalar_select %p104, %s105, %s106
      %p110 = pneg %p104
      %p111 = scmp.eq.s32.totalorder %s20, 1
      %p112 = por %p110, %p111
      %p113 = scmp.ne.s32.totalorder %s105, %s108
      %p114 = scmp.eq.s32.totalorder %s20, 0
      %p115 = por %p113, %p114
      %p116 = scmp.ne.s32.totalorder %s105, %s108
      %p117 = scmp.eq.s32.totalorder %s25, 1
      %p118 = por %p116, %p117
      %p119 = scmp.ne.s32.totalorder %s108, %s109
      %p120 = scmp.eq.s32.totalorder %s25, 0
      %p121 = por %p119, %p120
      %p122 = scmp.ne.s32.totalorder %s108, %s109
      %p123 = scmp.eq.s32.totalorder %s26, 1
      %p124 = por %p122, %p123
      %p126 = scmp.ne.s32.totalorder %s109, %s125
      %p127 = scmp.eq.s32.totalorder %s26, 0
      %p128 = por %p126, %p127
      %s129 = ssub.s32 %s27, %s39
      %s130 = ssub.s32 %s28, %s35
      %s131 = sor.u32 %s129, %s130
      %p132 = scmp.eq.s32.totalorder %s131, 0
      %s134 = sadd.s32 %s133, 1
      %s135 = scalar_select %p132, %s133, %s134
      %p138 = pneg %p132
      %p139 = scmp.eq.s32.totalorder %s20, 1
      %p140 = por %p138, %p139
      %p141 = scmp.ne.s32.totalorder %s133, %s136
      %p142 = scmp.eq.s32.totalorder %s20, 0
      %p143 = por %p141, %p142
      %p144 = scmp.ne.s32.totalorder %s133, %s136
      %p145 = scmp.eq.s32.totalorder %s25, 1
      %p146 = por %p144, %p145
      %p147 = scmp.ne.s32.totalorder %s136, %s137
      %p148 = scmp.eq.s32.totalorder %s25, 0
      %p149 = por %p147, %p148
      %p150 = scmp.ne.s32.totalorder %s136, %s137
      %p151 = scmp.eq.s32.totalorder %s26, 1
      %p152 = por %p150, %p151
      %p154 = scmp.ne.s32.totalorder %s137, %s153
      %p155 = scmp.eq.s32.totalorder %s26, 0
      %p156 = por %p154, %p155
      %s157 = ssub.s32 %s27, %s39
      %s158 = ssub.s32 %s28, %s35
      %s159 = sor.u32 %s157, %s158
      %p160 = scmp.eq.s32.totalorder %s159, 0
      %s162 = sadd.s32 %s161, 1
      %s163 = scalar_select %p160, %s161, %s162
      %p166 = pneg %p160
      %p167 = scmp.eq.s32.totalorder %s20, 1
      %p168 = por %p166, %p167
      %p169 = scmp.ne.s32.totalorder %s161, %s164
      %p170 = scmp.eq.s32.totalorder %s20, 0
      %p171 = por %p169, %p170
      %p172 = scmp.ne.s32.totalorder %s161, %s164
      %p173 = scmp.eq.s32.totalorder %s25, 1
      %p174 = por %p172, %p173
      %p175 = scmp.ne.s32.totalorder %s164, %s165
      %p176 = scmp.eq.s32.totalorder %s25, 0
      %p177 = por %p175, %p176
      %p178 = scmp.ne.s32.totalorder %s164, %s165
      %p179 = scmp.eq.s32.totalorder %s26, 1
      %p180 = por %p178, %p179
      %p182 = scmp.ne.s32.totalorder %s165, %s181
      %p183 = scmp.eq.s32.totalorder %s26, 0
      %p184 = por %p182, %p183
      %s185 = ssub.s32 %s27, %s39
      %p186 = scmp.eq.s32.totalorder %s185, 0
      %s188 = sadd.s32 %s187, 1
      %s189 = scalar_select %p186, %s187, %s188
      %p192 = pneg %p186
      %p193 = scmp.eq.s32.totalorder %s20, 1
      %p194 = por %p192, %p193
      %p195 = scmp.ne.s32.totalorder %s187, %s190
      %p196 = scmp.eq.s32.totalorder %s20, 0
      %p197 = por %p195, %p196
      %p198 = scmp.ne.s32.totalorder %s187, %s190
      %p199 = scmp.eq.s32.totalorder %s25, 1
      %p200 = por %p198, %p199
      %p201 = scmp.ne.s32.totalorder %s190, %s191
      %p202 = scmp.eq.s32.totalorder %s25, 0
      %p203 = por %p201, %p202
      %p204 = scmp.ne.s32.totalorder %s190, %s191
      %p205 = scmp.eq.s32.totalorder %s26, 1
      %p206 = por %p204, %p205
      %p208 = scmp.ne.s32.totalorder %s191, %s207
      %p209 = scmp.eq.s32.totalorder %s26, 0
      %p210 = por %p208, %p209
      %p211 = scmp.le.s32.totalorder 1, %s20
      %p212 = scmp.lt.s32.totalorder %s20, 3
      %p213 = pnand %p211, %p212
      %p214 = pneg %p213
      // Predicated region
      $region9: #{tpu_custom_call.1} parent=5 // pred_check
        _
      $region10: #{tpu_custom_call.1} parent=5 // pred_check_branch
        %216 = sbr.rel (%p213) target = $region12
      $region11: #{tpu_custom_call.1} parent=5 // pred_region
        %s217 = ssub.s32 %s20, 1
        // Predicated region
        $region13: #{tpu_custom_call.1} parent=11 // pred_check
          %p218 = pneg %p53
        $region14: #{tpu_custom_call.1} parent=11 // pred_check_branch
          %220 = sbr.rel (%p218) target = $region16
        $region15: #{tpu_custom_call.1} parent=11 // pred_region
          %222 = vsyncadd [#allocation4], 0
          %s223 = sshll.u32 %s0, 4
          %s224 = int_to_ptr.hbm [resolvable:$true] %s223
          %s225 = sshll.u32 [#allocation3], 4
          %s226 = int_to_ptr.vmem [resolvable:$true] %s225
          %231 = dma.hbm_to_vmem [thread:$0]  %s224, 1024, %s226, [#allocation4], 64, 64, 4
        $region16: #{tpu_custom_call.1} parent=11 // pred_fallthru
          _
        // Predicated region
        $region17: #{tpu_custom_call.1} parent=11 // pred_check
          %p232 = pneg %p74
        $region18: #{tpu_custom_call.1} parent=11 // pred_check_branch
          %234 = sbr.rel (%p232) target = $region20
        $region19: #{tpu_custom_call.1} parent=11 // pred_region
          %236 = vsyncadd [#allocation7], 0
          %s238 = sshll.u32 %s1, 4
          %s239 = int_to_ptr.hbm [resolvable:$true] %s238
          %s240 = sshll.u32 [#allocation6], 4
          %s241 = int_to_ptr.vmem [resolvable:$true] %s240
          %243 = dma.hbm_to_vmem [thread:$0]  %s239, 64, %s241, [#allocation7]
        $region20: #{tpu_custom_call.1} parent=11 // pred_fallthru
          _
        // Predicated region
        $region21: #{tpu_custom_call.1} parent=11 // pred_check
          %p244 = pneg %p95
        $region22: #{tpu_custom_call.1} parent=11 // pred_check_branch
          %246 = sbr.rel (%p244) target = $region24
        $region23: #{tpu_custom_call.1} parent=11 // pred_region
          %248 = vsyncadd [#allocation7], 0
          %s250 = sshll.u32 %s2, 4
          %s251 = int_to_ptr.hbm [resolvable:$true] %s250
          %s252 = sshll.u32 [#allocation8], 4
          %s253 = int_to_ptr.vmem [resolvable:$true] %s252
          %255 = dma.hbm_to_vmem [thread:$0]  %s251, 128, %s253, [#allocation7]
        $region24: #{tpu_custom_call.1} parent=11 // pred_fallthru
          _
      $region12: #{tpu_custom_call.1} parent=5 // pred_fallthru
        _
      %p256 = scmp.lt.s32.totalorder %s20, 2
      // Predicated region
      $region25: #{tpu_custom_call.1} parent=5 // pred_check
        %p257 = pneg %p256
      $region26: #{tpu_custom_call.1} parent=5 // pred_check_branch
        %259 = sbr.rel (%p257) target = $region28
      $region27: #{tpu_custom_call.1} parent=5 // pred_region
        // Predicated region
        $region29: #{tpu_custom_call.1} parent=27 // pred_check
          %p260 = pneg %p115
        $region30: #{tpu_custom_call.1} parent=27 // pred_check_branch
          %262 = sbr.rel (%p260) target = $region32
        $region31: #{tpu_custom_call.1} parent=27 // pred_region
          %p263 = scmp.lt.s32.totalorder %s27, 1
          %s264 = scalar_select %p263, %s27, 1
          %s265 = scalar_lea.vmem %s3, %s264
        $region32: #{tpu_custom_call.1} parent=27 // pred_fallthru
          _
        // Predicated region
        $region33: #{tpu_custom_call.1} parent=27 // pred_check
          %p266 = pneg %p143
        $region34: #{tpu_custom_call.1} parent=27 // pred_check_branch
          %268 = sbr.rel (%p266) target = $region36
        $region35: #{tpu_custom_call.1} parent=27 // pred_region
          %s269 = sand.u32 %s20, 1
          %s270 = scalar_lea.sflag [#allocation10], %s269
          %s271 = sand.u32 %s133, 1
          %s272 = smul.addr %s271, 8
          %s273 = scalar_lea.vmem [#allocation9], %s272
          %275 = vsyncadd %s270, 0
          %s276 = sadd.s32 %s28, %s27
          %s277 = smul.addr %s276, 8
          %s278 = scalar_lea.hbm %s4, %s277
          %s280 = sshll.u32 %s278, 4
          %s281 = int_to_ptr.hbm [resolvable:$true] %s280
          %s282 = sshll.u32 %s273, 4
          %s283 = int_to_ptr.vmem [resolvable:$true] %s282
          %285 = dma.hbm_to_vmem [thread:$0]  %s281, 128, %s283, %s270
        $region36: #{tpu_custom_call.1} parent=27 // pred_fallthru
          _
        // Predicated region
        $region37: #{tpu_custom_call.1} parent=27 // pred_check
          %p286 = pneg %p171
        $region38: #{tpu_custom_call.1} parent=27 // pred_check_branch
          %288 = sbr.rel (%p286) target = $region40
        $region39: #{tpu_custom_call.1} parent=27 // pred_region
          %s289 = sand.u32 %s20, 1
          %s290 = scalar_lea.sflag [#allocation10], %s289
          %s291 = sand.u32 %s161, 1
          %s292 = smul.addr %s291, 4
          %s293 = scalar_lea.vmem [#allocation11], %s292
          %295 = vsyncadd %s290, 0
          %s296 = sadd.s32 %s28, %s27
          %s297 = smul.addr %s296, 4
          %s298 = scalar_lea.hbm %s5, %s297
          %s300 = sshll.u32 %s298, 4
          %s301 = int_to_ptr.hbm [resolvable:$true] %s300
          %s302 = sshll.u32 %s293, 4
          %s303 = int_to_ptr.vmem [resolvable:$true] %s302
          %305 = dma.hbm_to_vmem [thread:$0]  %s301, 64, %s303, %s290
        $region40: #{tpu_custom_call.1} parent=27 // pred_fallthru
          _
      $region28: #{tpu_custom_call.1} parent=5 // pred_fallthru
        _
      %p306 = scmp.le.s32.totalorder 1, %s20
      %p307 = scmp.lt.s32.totalorder %s20, 3
      %p308 = pnand %p306, %p307
      %p309 = pneg %p308
      // Predicated region
      $region41: #{tpu_custom_call.1} parent=5 // pred_check
        _
      $region42: #{tpu_custom_call.1} parent=5 // pred_check_branch
        %311 = sbr.rel (%p308) target = $region44
      $region43: #{tpu_custom_call.1} parent=5 // pred_region
        %s312 = ssub.s32 %s20, 1
        // Predicated region
        $region45: #{tpu_custom_call.1} parent=43 // pred_check
          %p313 = pneg %p53
        $region46: #{tpu_custom_call.1} parent=43 // pred_check_branch
          %315 = sbr.rel (%p313) target = $region48
        $region47: #{tpu_custom_call.1} parent=43 // pred_region
          %317 = dma.done [#allocation4], 1024
        $region48: #{tpu_custom_call.1} parent=43 // pred_fallthru
          _
        // Predicated region
        $region49: #{tpu_custom_call.1} parent=43 // pred_check
          %p318 = pneg %p74
        $region50: #{tpu_custom_call.1} parent=43 // pred_check_branch
          %320 = sbr.rel (%p318) target = $region52
        $region51: #{tpu_custom_call.1} parent=43 // pred_region
          %322 = dma.done [#allocation7], 64
        $region52: #{tpu_custom_call.1} parent=43 // pred_fallthru
          _
        // Predicated region
        $region53: #{tpu_custom_call.1} parent=43 // pred_check
          %p323 = pneg %p95
        $region54: #{tpu_custom_call.1} parent=43 // pred_check_branch
          %325 = sbr.rel (%p323) target = $region56
        $region55: #{tpu_custom_call.1} parent=43 // pred_region
          %327 = dma.done [#allocation7], 128
        $region56: #{tpu_custom_call.1} parent=43 // pred_fallthru
          _
        %s328 = sand.u32 %s25, 1
        %s329 = scalar_lea.sflag [#allocation10], %s328
        %s330 = sand.u32 %s136, 1
        %s331 = smul.addr %s330, 8
        %s332 = scalar_lea.vmem [#allocation9], %s331
        // Predicated region
        $region57: #{tpu_custom_call.1} parent=43 // pred_check
          %p333 = pneg %p149
        $region58: #{tpu_custom_call.1} parent=43 // pred_check_branch
          %335 = sbr.rel (%p333) target = $region60
        $region59: #{tpu_custom_call.1} parent=43 // pred_region
          %337 = dma.done %s329, 128
        $region60: #{tpu_custom_call.1} parent=43 // pred_fallthru
          _
        %s338 = sand.u32 %s25, 1
        %s339 = scalar_lea.sflag [#allocation10], %s338
        %s340 = sand.u32 %s164, 1
        %s341 = smul.addr %s340, 4
        %s342 = scalar_lea.vmem [#allocation11], %s341
        // Predicated region
        $region61: #{tpu_custom_call.1} parent=43 // pred_check
          %p343 = pneg %p177
        $region62: #{tpu_custom_call.1} parent=43 // pred_check_branch
          %345 = sbr.rel (%p343) target = $region64
        $region63: #{tpu_custom_call.1} parent=43 // pred_region
          %347 = dma.done %s339, 64
        $region64: #{tpu_custom_call.1} parent=43 // pred_fallthru
          _
        %p348 = pneg %p53
        %p349 = pneg %p50
        %p350 = pneg %p74
        %p351 = pneg %p71
        %p352 = pneg %p95
        %p353 = pneg %p92
        %p354 = scmp.lt.s32.totalorder %s29, 1
        %s355 = scalar_select %p354, %s29, 1
        %s356 = scalar_lea.vmem %s3, %s355
        %p357 = pneg %p121
        %p358 = pneg %p118
        %s359 = sand.u32 %s25, 1
        %s360 = scalar_lea.sflag [#allocation10], %s359
        %s361 = sand.u32 %s136, 1
        %s362 = smul.addr %s361, 8
        %s363 = scalar_lea.vmem [#allocation9], %s362
        %p364 = pneg %p149
        %p365 = pneg %p146
        %s366 = sand.u32 %s25, 1
        %s367 = scalar_lea.sflag [#allocation10], %s366
        %s368 = sand.u32 %s164, 1
        %s369 = smul.addr %s368, 4
        %s370 = scalar_lea.vmem [#allocation11], %s369
        %p371 = pneg %p177
        %p372 = pneg %p174
        %p373 = pneg %p203
        %p374 = pneg %p200
        %s375 = sand.u32 %s190, 1
        %s376 = scalar_lea.sflag [#allocation5], %s375
        %s377 = sand.u32 %s190, 1
        %s378 = scalar_lea.vmem [#allocation12], %s377
        %p379 = scmp.lt.s32.totalorder %s29, 1
        %s380 = scalar_select %p379, %s29, 1
        %s381 = scalar_lea.vmem %s3, %s380
        %p383 = scmp.eq.s32.totalorder %s30, 0
        // Predicated region
        $region65: #{tpu_custom_call.1} parent=43 // pred_check
          %p384 = pneg %p383
        $region66: #{tpu_custom_call.1} parent=43 // pred_check_branch
          %386 = sbr.rel (%p384) target = $region68
        $region67: #{tpu_custom_call.1} parent=43 // pred_region
          %387 = vst [vmem:[%s378] sm:$0x1] 0.0
          %388 = vst [vmem:[#allocation2] sm:$0x1] 0.0
        $region68: #{tpu_custom_call.1} parent=43 // pred_fallthru
          _
        %v389 = vld [vmem:[%s342] sm:$0xf]
        %v390 = vunpack.c.l.bf16 %v389
        %v391 = vld [vmem:[%s332] sm:$0xff]
        %v392 = vld [vmem:[#allocation3] sm:$0xf]
        %v393 = vld [vmem:[#allocation3 + $0x4] sm:$0xf]
        %v394 = vld [vmem:[#allocation3 + $0x8] sm:$0xf]
        %v395 = vld [vmem:[#allocation3 + $0xc] sm:$0xf]
        %v396 = vld [vmem:[#allocation3 + $0x10] sm:$0xf]
        %v397 = vld [vmem:[#allocation3 + $0x14] sm:$0xf]
        %v398 = vld [vmem:[#allocation3 + $0x18] sm:$0xf]
        %v399 = vld [vmem:[#allocation3 + $0x1c] sm:$0xf]
        %v400 = vld [vmem:[#allocation3 + $0x20] sm:$0xf]
        %v401 = vld [vmem:[#allocation3 + $0x24] sm:$0xf]
        %v402 = vld [vmem:[#allocation3 + $0x28] sm:$0xf]
        %v403 = vld [vmem:[#allocation3 + $0x2c] sm:$0xf]
        %v404 = vld [vmem:[#allocation3 + $0x30] sm:$0xf]
        %v405 = vld [vmem:[#allocation3 + $0x34] sm:$0xf]
        %v406 = vld [vmem:[#allocation3 + $0x38] sm:$0xf]
        %v407 = vld [vmem:[#allocation3 + $0x3c] sm:$0xf]
        %408 = vadd.xlane.f32.xlu0 %v390
        %v409 = vpop.xlane.xlu0 %408
        %v410 = vpack.c.bf16 %v409, %v409
        %v411 = vld [vmem:[#allocation6] sm:$0xf]
        %vm412 = vcmask 64512
        %v414 = vsel %vm412, %v411, 0
        %vm416 = vcmask 1043456
        %v418 = vsel %vm416, %v410, 0
        %420 = vmatpush.bf16.msra.mxu0 0
        %421 = vmatpush.bf16.msra.mxu0 0
        %422 = vmatpush.bf16.msra.mxu0 0
        %423 = vmatpush.bf16.msra.mxu0 0
        %424 = vmatpush.bf16.msra.mxu0 0
        %425 = vmatpush.bf16.msra.mxu0 0
        %426 = vmatpush.bf16.msra.mxu0 0
        %427 = vmatpush.bf16.msra.mxu0 %v418
        %428 = vmatmul.bf16.gmra.mxu0 %v414
        %v429 = vpop.f32.mrf.mxu0
        %v430 = vadd.f32 0.0, %v429
        %v431 = vpop.f32.mrf.mxu0
        %432 = vdwg.mxu0
        %v433 = vld [vmem:[#allocation2] sm:$0x1]
        %v450 = vunpack.c.l.b16 %v392
        %v451 = vunpack.c.l.b16 %v393
        %v452 = vunpack.c.l.b16 %v394
        %v453 = vunpack.c.l.b16 %v395
        %v454 = vunpack.c.l.b16 %v396
        %v455 = vunpack.c.l.b16 %v397
        %v456 = vunpack.c.l.b16 %v398
        %v457 = vunpack.c.l.b16 %v399
        %v458 = vunpack.c.l.b16 %v400
        %v459 = vunpack.c.l.b16 %v401
        %v460 = vunpack.c.l.b16 %v402
        %v461 = vunpack.c.l.b16 %v403
        %v462 = vunpack.c.l.b16 %v404
        %v463 = vunpack.c.l.b16 %v405
        %v464 = vunpack.c.l.b16 %v406
        %v465 = vunpack.c.l.b16 %v407
        %v466 = vpack.c.b16 %v451, %v450
        %v467 = vpack.c.b16 %v453, %v452
        %v468 = vpack.c.b16 %v455, %v454
        %v469 = vpack.c.b16 %v457, %v456
        %v470 = vpack.c.b16 %v459, %v458
        %v471 = vpack.c.b16 %v461, %v460
        %v472 = vpack.c.b16 %v463, %v462
        %v473 = vpack.c.b16 %v465, %v464
        %482 = vmatpush.bf16.msra.mxu0 %v473
        %483 = vmatpush.bf16.msra.mxu0 %v472
        %484 = vmatpush.bf16.msra.mxu0 %v471
        %485 = vmatpush.bf16.msra.mxu0 %v470
        %486 = vmatpush.bf16.msra.mxu0 %v469
        %487 = vmatpush.bf16.msra.mxu0 %v468
        %488 = vmatpush.bf16.msra.mxu0 %v467
        %489 = vmatpush.bf16.msra.mxu0 %v466
        %490 = vmatmul.bf16.gmra.mxu0 %v389
        %v491 = vpop.f32.mrf.mxu0
        %v492 = vadd.f32 %v430, %v491
        %v493 = vpop.f32.mrf.mxu0
        %494 = vdwg.mxu0
        %v496 = vperm.slane %v433, 0
        %v498 = vadd.f32 %v492, %v496
        %v499 = vld [vmem:[%s381] sm:$0x1]
        %v500 = vld [vmem:[#allocation8] sm:$0xff]
        %s501 = smul.u32 %s30, 1024
        %s502 = scvt.s32.f32 %s501
        %v503 = vstv %s502
        %v504 = vadd.f32 %v500, %v503
        %v506 = vperm.slane %v499, 0
        %v508 = vsub.f32 %v506, %v498
        %v509 = vadd.f32 %v506, %v504
        %v510 = vsub.f32 %v509, %v498
        %v511 = vadd.f32 %v508, %v390
        %v512 = vsub.f32 %v390, 1.0
        %v513 = vadd.f32 %v510, %v512
        %vm514 = vcmp.eq.f32.partialorder %v504, 1.0
        %v515 = vsel %vm514, 1.0, %v511
        %v516 = vsel %vm514, 1.0, %v513
        %v517 = vmul.f32 %v515, %v510
        %v518 = vmul.f32 %v508, %v516
        %v519 = vsub.f32 %v517, %v518
        %v520 = vmul.f32 %v510, %v516
        %v521 = vrcp.pop %v520
        %v522 = vmul.f32 %v520, %v521
        %v523 = vsub.f32 1.0, %v522
        %v524 = vmul.f32 %v521, %v523
        %v525 = vadd.f32 %v521, %v524
        %vm526 = vweird.f32 %v520
        %vm527 = vweird.f32 %v521
        %vm528 = vmor %vm526, %vm527
        %v529 = vsel %vm528, %v521, %v525
        %v530 = vand.u32 2147483647, %v520
        %vm531 = vcmp.eq.f32.partialorder %v530, 8.507059e+37
        %v532 = vand.u32 %v520, 2147483648
        %v533 = vor.u32 1.1754944e-38, %v532
        %v534 = vsel %vm531, %v533, %v529
        %v535 = vmul.f32 %v519, %v534
        %v536 = vmax.f32 %v391, 0.0
        %v537 = vmul.f32 %v536, %v535
        %v538 = vld [vmem:[%s378] sm:$0x1]
        %v539 = vrot.slane %v537, 4
        %v540 = vadd.f32 %v537, %v539
        %v541 = vrot.slane %v540, 2
        %v542 = vadd.f32 %v540, %v541
        %v543 = vrot.slane %v542, 1
        %v544 = vadd.f32 %v542, %v543
        %v545 = vadd.f32 %v538, %v544
        %546 = vst [vmem:[%s378] sm:$0x1] %v545
        %v547 = vrot.slane %v409, 4
        %v548 = vadd.f32 %v409, %v547
        %v549 = vrot.slane %v548, 2
        %v550 = vadd.f32 %v548, %v549
        %v551 = vrot.slane %v550, 1
        %v552 = vadd.f32 %v550, %v551
        %v553 = vadd.f32 %v433, %v552
        %554 = vst [vmem:[#allocation2] sm:$0x1] %v553
        %s555 = sand.u32 %s190, 1
        %s556 = scalar_lea.sflag [#allocation5], %s555
        %s557 = sand.u32 %s190, 1
        %s558 = scalar_lea.vmem [#allocation12], %s557
        // Predicated region
        $region69: #{tpu_custom_call.1} parent=43 // pred_check
          %p559 = pneg %p200
        $region70: #{tpu_custom_call.1} parent=43 // pred_check_branch
          %561 = sbr.rel (%p559) target = $region72
        $region71: #{tpu_custom_call.1} parent=43 // pred_region
          %563 = vsyncadd %s556, 0
          %s564 = scalar_lea.hbm %s6, %s29
          %s566 = sshll.u32 %s558, 4
          %s567 = int_to_ptr.vmem [resolvable:$true] %s566
          %s568 = sshll.u32 %s564, 4
          %s569 = int_to_ptr.hbm [resolvable:$true] %s568
          %571 = dma.vmem_to_hbm [thread:$0]  %s567, 16, %s569, %s556
        $region72: #{tpu_custom_call.1} parent=43 // pred_fallthru
          _
      $region44: #{tpu_custom_call.1} parent=5 // pred_fallthru
        _
      %p572 = scmp.le.s32.totalorder 2, %s20
      // Predicated region
      $region73: #{tpu_custom_call.1} parent=5 // pred_check
        %p573 = pneg %p572
      $region74: #{tpu_custom_call.1} parent=5 // pred_check_branch
        %575 = sbr.rel (%p573) target = $region76
      $region75: #{tpu_custom_call.1} parent=5 // pred_region
        %s576 = ssub.s32 %s20, 2
        // Predicated region
        $region77: #{tpu_custom_call.1} parent=75 // pred_check
          %p577 = pneg %p206
        $region78: #{tpu_custom_call.1} parent=75 // pred_check_branch
          %579 = sbr.rel (%p577) target = $region80
        $region79: #{tpu_custom_call.1} parent=75 // pred_region
          %s580 = sand.u32 %s191, 1
          %s581 = scalar_lea.sflag [#allocation5], %s580
          %s582 = sand.u32 %s191, 1
          %s583 = scalar_lea.vmem [#allocation12], %s582
          %585 = dma.done %s581, 16
        $region80: #{tpu_custom_call.1} parent=75 // pred_fallthru
          _
      $region76: #{tpu_custom_call.1} parent=5 // pred_fallthru
        _
    $region6: #{tpu_custom_call.1} parent=1 // loop_footer
      %s24 = sadd.s32 1, %s20
    $region7: #{tpu_custom_call.1} parent=1 // loop_footer_branch
      %19 = sbr.rel target = $region3
    $region8: #{tpu_custom_call.1} parent=1 // loop_exit
      _
    %586 = vsyncpa [#allocation4], 1
    %s587 = scalar_lea.sflag [#allocation4], 1
    %588 = vsyncpa %s587, 1
    %589 = vsyncpa [#allocation7], 1
    %590 = vsyncpa [#allocation10], 1
    %s591 = scalar_lea.sflag [#allocation10], 1
    %592 = vsyncpa %s591, 1
    %593 = vsyncpa [#allocation5], 1
    %s594 = scalar_lea.sflag [#allocation5], 1
    %595 = vsyncpa %s594, 1

</llo_original>
